<compile_context>
chip_gen: v5e
topology: v5e:2x2
jax: 0.10.0
libtpu: 0.0.40
codegen_flags: <defaults>
</compile_context>

<pallas_src>
import jax
import jax.numpy as jnp
from jax.experimental import pallas as pl
from jax.experimental.pallas import tpu as pltpu

_LANE = 128
_SUBLANE = 8


def _round_up(x, m):
    return ((x + m - 1) // m) * m


def _classifier_kernel(h_ref, wt_ref, b_ref, out_ref):
    """One (batch-tile, class-tile) block of  out = h @ W^T + b.

    h_ref  : [TILE_B, D]        streamed over the batch grid axis
    wt_ref : [D, TILE_C]        pre-transposed weight (resident, or streamed over C)
    b_ref  : [1, TILE_C]        bias row
    out_ref: [TILE_B, TILE_C]
    """
    acc = jnp.dot(h_ref[...], wt_ref[...], preferred_element_type=jnp.float32)
    out_ref[...] = (acc + b_ref[...].astype(jnp.float32)).astype(out_ref.dtype)


def _vmem_budget_bytes():
    """Generation-aware VMEM budget (~70% of physical capacity)."""
    cap = None
    try:
        info = pltpu.get_tpu_info()
        cap = int(getattr(info, "vmem_capacity_bytes", 0)) or None
    except Exception:
        cap = None
    if cap is None:
        cap = 64 * 1024 * 1024  # conservative fallback: v7x physical VMEM
    return int(cap * 0.70)


def _choose_tiles(B, D, C, itemsize, budget):
    """Pick (tile_b, tile_c) respecting the (8, 128) layout rules and the VMEM budget."""

    # --- class tile: keep the whole weight resident unless it is too big --------
    def w_bytes(tc):  # double-buffered weight + bias blocks
        return 2 * (D * tc + tc) * itemsize

    if C <= _LANE or w_bytes(C) <= budget // 2:
        tile_c = C                    # full class dim (block == full dim is legal)
    else:
        tile_c = _LANE                # streamed over classes; must be a multiple of 128
        for cand in (2048, 1024, 512, 256):
            if cand < C and w_bytes(cand) <= budget // 2:
                tile_c = cand
                break
    # TODO(synk): single-buffer (pl.Buffered(1)) the resident weight/bias blocks once
    # uniformly available; with the generation-aware budget it is not the limiter here.

    # --- batch tile: as large as fits, but keep >= 2 grid steps for megacore ----
    remaining = max(budget - w_bytes(tile_c), 2 * _SUBLANE * (D + tile_c) * itemsize)
    if B <= _SUBLANE:
        tile_b = B                    # single block equal to the full batch dim
    else:
        tile_b = _SUBLANE
        for cand in (1024, 512, 256, 128, 64, 32, 16, 8):
            if 2 * cand * (D + tile_c) * itemsize <= remaining:
                tile_b = cand
                break
        # Guarantee >= 2 batch steps so the "parallel" axis has work for both
        # v7x TensorCores (no effect on 1-TC v5e/v6e beyond tile size).
        half = _round_up(pl.cdiv(B, 2), _SUBLANE)
        tile_b = max(_SUBLANE, min(tile_b, half, _round_up(B, _SUBLANE)))
    return tile_b, tile_c


def classifier_forward(h, weight_t, bias, *, compute_dtype=None, force_pallas=False):
    """h: [B, D], weight_t: [D, C] (pre-transposed), bias: [C] or [1, C] -> [B, C]."""
    B, D = h.shape
    C = weight_t.shape[1]
    out_dtype = h.dtype

    bias2d = bias.reshape(1, C)

    # Tiny problems: launch + DMA setup cost more than the matmul; let XLA fuse it.
    if not force_pallas and B * D < 4096:
        return (jnp.dot(h, weight_t, preferred_element_type=jnp.float32)
                + bias2d.astype(jnp.float32)).astype(out_dtype)

    # Optional reduced-precision storage (halves dominant HBM traffic); accumulation
    # stays f32 either way. Default (None) keeps exact nn.Linear numerics.
    if compute_dtype is not None:
        h = h.astype(compute_dtype)
        weight_t = weight_t.astype(compute_dtype)

    itemsize = max(jnp.dtype(h.dtype).itemsize,
                   jnp.dtype(weight_t.dtype).itemsize,
                   jnp.dtype(out_dtype).itemsize)
    budget = _vmem_budget_bytes()
    tile_b, tile_c = _choose_tiles(B, D, C, itemsize, budget)

    nb = pl.cdiv(B, tile_b)
    nc = pl.cdiv(C, tile_c)

    # Rough traffic estimate for XLA's scheduler: h is reused across the class axis
    # (constant block index over j); the weight is re-read per batch tile only when
    # the class axis is actually tiled.
    w_reads = 1 if nc == 1 else nb
    cost = pl.CostEstimate(
        flops=2 * B * D * C,
        transcendentals=0,
        bytes_accessed=(B * D + w_reads * C * D + C) * itemsize
        + B * C * jnp.dtype(out_dtype).itemsize,
    )

    return pl.pallas_call(
        _classifier_kernel,
        out_shape=jax.ShapeDtypeStruct((B, C), out_dtype),
        grid_spec=pltpu.PrefetchScalarGridSpec(
            num_scalar_prefetch=0,
            grid=(nb, nc),
            in_specs=[
                pl.BlockSpec((tile_b, D), lambda i, j: (i, 0)),   # h: streamed over B
                pl.BlockSpec((D, tile_c), lambda i, j: (0, j)),   # W^T: resident / over C
                pl.BlockSpec((1, tile_c), lambda i, j: (0, j)),   # bias
            ],
            out_specs=pl.BlockSpec((tile_b, tile_c), lambda i, j: (i, j)),
        ),
        compiler_params=pltpu.CompilerParams(
            dimension_semantics=("parallel", "arbitrary"),
            vmem_limit_bytes=budget,
        ),
        cost_estimate=cost,
    )(h, weight_t, bias2d)


class ClassifierPallas:
    """JAX/Pallas counterpart of the PyTorch Classifier (dropout=0, manifold=None)."""

    def __init__(self, model_dim, num_classes, key, compute_dtype=None):
        self.model_dim = model_dim
        self.num_classes = num_classes
        input_dim = model_dim * 2
        kw, kb = jax.random.split(key)
        # nn.Linear-style uniform(-1/sqrt(fan_in), 1/sqrt(fan_in)) init.
        bound = 1.0 / (input_dim ** 0.5)
        self.weight = jax.random.uniform(
            kw, (num_classes, input_dim), jnp.float32, minval=-bound, maxval=bound
        )
        self.bias = jax.random.uniform(
            kb, (num_classes,), jnp.float32, minval=-bound, maxval=bound
        )
        # Pre-transpose ONCE so the kernel never transposes per grid step.
        self.weight_t = jnp.asarray(self.weight.T)   # [D, C]
        self.compute_dtype = compute_dtype
        # TODO(synk): classifier_dropout > 0 (train-time dropout) and manifold
        # proj_tan0 are not implemented (module defaults: dropout=0.0, manifold=None).

    def __call__(self, h, adj=None, force_pallas=False):
        return classifier_forward(
            h, self.weight_t, self.bias,
            compute_dtype=self.compute_dtype, force_pallas=force_pallas,
        )


if __name__ == "__main__":
    key = jax.random.PRNGKey(0)
    k_param, k_small, k_big, k_rag = jax.random.split(key, 4)

    model_dim = 32
    num_classes = 8
    D = model_dim * 2

    clf = ClassifierPallas(model_dim, num_classes, k_param)

    # 1) Small demo batch (batch=2), forced through the Pallas kernel (single block).
    h_small = jax.random.normal(k_small, (2, D), jnp.float32)
    logits = jax.block_until_ready(clf(h_small, force_pallas=True))
    ref = h_small @ clf.weight.T + clf.bias
    assert logits.shape == (2, num_classes)
    assert jnp.allclose(logits, ref, atol=1e-5, rtol=1e-5)

    # 2) Large batch: exercises the multi-step batch grid (2 "parallel" tiles).
    h_big = jax.random.normal(k_big, (2000, D), jnp.float32)
    logits_big = jax.block_until_ready(clf(h_big))
    ref_big = h_big @ clf.weight.T + clf.bias
    assert logits_big.shape == (2000, num_classes)
    assert jnp.allclose(logits_big, ref_big, atol=1e-4, rtol=1e-4)

    # 3) Ragged batch: last block is partially out of bounds (masked write-back).
    h_rag = jax.random.normal(k_rag, (130, D), jnp.float32)
    logits_rag = jax.block_until_ready(clf(h_rag))
    ref_rag = h_rag @ clf.weight.T + clf.bias
    assert logits_rag.shape == (130, num_classes)
    assert jnp.allclose(logits_rag, ref_rag, atol=1e-4, rtol=1e-4)

    print("KERNEL_OK")
</pallas_src>

<mosaic_0001>
module attributes {stable_mosaic.version = 11 : i64} {
  func.func @_classifier_kernel(%arg0: i32, %arg1: i32, %arg2: memref<2x64xf32, #tpu.memory_space<vmem>>, %arg3: memref<64x8xf32, #tpu.memory_space<vmem>>, %arg4: memref<1x8xf32, #tpu.memory_space<vmem>>, %arg5: memref<2x8xf32, #tpu.memory_space<vmem>>) attributes {dimension_semantics = [#tpu.dimension_semantics<parallel>, #tpu.dimension_semantics<arbitrary>], iteration_bounds = array<i64: 1, 1>, scalar_prefetch = 0 : i64, scratch_operands = 0 : i64, tpu.core_type = #tpu.core_type<tc>, window_params = [{transform_indices = @transform_0, window_bounds = array<i64: 2, 64>}, {transform_indices = @transform_1, window_bounds = array<i64: 64, 8>}, {transform_indices = @transform_2, window_bounds = array<i64: 1, 8>}, {transform_indices = @transform_3, window_bounds = array<i64: 2, 8>}]} {
    %c0 = arith.constant 0 : index
    %c0_0 = arith.constant 0 : index
    %0 = vector.load %arg2[%c0, %c0_0] : memref<2x64xf32, #tpu.memory_space<vmem>>, vector<2x64xf32>
    %c0_1 = arith.constant 0 : index
    %c0_2 = arith.constant 0 : index
    %1 = vector.load %arg3[%c0_1, %c0_2] : memref<64x8xf32, #tpu.memory_space<vmem>>, vector<64x8xf32>
    %cst = arith.constant dense<0.000000e+00> : vector<2x8xf32>
    %2 = tpu.matmul %0, %1, %cst {dimension_numbers = #tpu.dot_dimension_numbers<[1], [0], [0], [1], [0, 0, 1, 1], [], []>} : vector<2x64xf32>, vector<64x8xf32>, vector<2x8xf32> -> vector<2x8xf32>
    %c0_3 = arith.constant 0 : index
    %c0_4 = arith.constant 0 : index
    %3 = vector.load %arg4[%c0_3, %c0_4] : memref<1x8xf32, #tpu.memory_space<vmem>>, vector<1x8xf32>
    %4 = vector.broadcast %3 : vector<1x8xf32> to vector<2x8xf32>
    %5 = arith.addf %2, %4 : vector<2x8xf32>
    %c0_5 = arith.constant 0 : index
    %c0_6 = arith.constant 0 : index
    %6 = vector.load %arg5[%c0_5, %c0_6] : memref<2x8xf32, #tpu.memory_space<vmem>>, vector<2x8xf32>
    tpu.vector_store %arg5[%c0_5, %c0_6], %5 {strides = array<i32>} : memref<2x8xf32, #tpu.memory_space<vmem>>, vector<2x8xf32>,
    return
  }
  func.func @transform_0(%arg0: i32, %arg1: i32) -> (i32, i32) {
    %c0_i32 = arith.constant 0 : i32
    %c0_i32_0 = arith.constant 0 : i32
    return %arg0, %c0_i32 : i32, i32
  }
  func.func @transform_1(%arg0: i32, %arg1: i32) -> (i32, i32) {
    %c0_i32 = arith.constant 0 : i32
    %c0_i32_0 = arith.constant 0 : i32
    return %c0_i32, %arg1 : i32, i32
  }
  func.func @transform_2(%arg0: i32, %arg1: i32) -> (i32, i32) {
    %c0_i32 = arith.constant 0 : i32
    %c0_i32_0 = arith.constant 0 : i32
    return %c0_i32, %arg1 : i32, i32
  }
  func.func @transform_3(%arg0: i32, %arg1: i32) -> (i32, i32) {
    %c0_i32 = arith.constant 0 : i32
    return %arg0, %arg1 : i32, i32
  }
}

</mosaic_0001>

<llo_original>
// kernel: tpu_custom_call.1
$region0: #{tpu_custom_call.1}
  #allocation0 [shape = 'u32[]', space=smem, size = 0x4, offset = 0x4, fixed_abs, tag = 'smem constant byte address 0x4 - core index']
  #allocation1 [shape = 'u32[72,128]{1,0:T(1,128)}', space=vmem, size = 0x9000, scoped, tag = 'internal scratch']
  %s0 = inlined_call_operand.vmem [shape: f32[2,64], index: 0, kind: input, shape index: {}]
  %s1 = inlined_call_operand.vmem [shape: f32[64,8], index: 1, kind: input, shape index: {}]
  %s2 = inlined_call_operand.vmem [shape: f32[1,8], index: 2, kind: input, shape index: {}]
  %s3 = inlined_call_operand.hbm [shape: f32[2,8], index: 3, kind: output, shape index: {}]
  %s4 = sld [smem:[#allocation0]]
  $region22: #{tpu_custom_call.1} parent=0
    _
  %s6 = ssub.s32 1, %s4
  %s7 = scalar_select 0, %s6, %s4
  $region1: #{tpu_custom_call.1} parent=0
    #allocation2 [shape = 'u8[1024]{0}', space=vmem, size = 0x400, scoped, tag = 'output window, operand 0, single buffered']
    #allocation3 [shape = 's32[1]{0}', space=sflag, size = 0x4, scoped, tag = 'scoped memory for tpu_custom_call.1']
    %8 = vsyncpa [#allocation3], 0
    // Predicated region
    $region2: #{tpu_custom_call.1} parent=1 // pred_check
      _
    $region3: #{tpu_custom_call.1} parent=1 // pred_check_branch
      %10 = sbr.rel (0) target = $region5
    $region4: #{tpu_custom_call.1} parent=1 // pred_region
      _
    $region5: #{tpu_custom_call.1} parent=1 // pred_fallthru
      _
    // Predicated region
    $region6: #{tpu_custom_call.1} parent=1 // pred_check
      _
    $region7: #{tpu_custom_call.1} parent=1 // pred_check_branch
      %12 = sbr.rel (0) target = $region9
    $region8: #{tpu_custom_call.1} parent=1 // pred_region
      _
    $region9: #{tpu_custom_call.1} parent=1 // pred_fallthru
      _
    // Predicated region
    $region10: #{tpu_custom_call.1} parent=1 // pred_check
      _
    $region11: #{tpu_custom_call.1} parent=1 // pred_check_branch
      %14 = sbr.rel (0) target = $region13
    $region12: #{tpu_custom_call.1} parent=1 // pred_region
      _
    $region13: #{tpu_custom_call.1} parent=1 // pred_fallthru
      _
    %v15 = vld [vmem:[%s0] sm:$0x3]
    %v16 = vld [vmem:[%s1] sm:$0xff]
    %v17 = vld [vmem:[%s1 + $0x8] sm:$0xff]
    %v18 = vld [vmem:[%s1 + $0x10] sm:$0xff]
    %v19 = vld [vmem:[%s1 + $0x18] sm:$0xff]
    %v20 = vld [vmem:[%s1 + $0x20] sm:$0xff]
    %v21 = vld [vmem:[%s1 + $0x28] sm:$0xff]
    %v22 = vld [vmem:[%s1 + $0x30] sm:$0xff]
    %v23 = vld [vmem:[%s1 + $0x38] sm:$0xff]
    %v24 = vld [vmem:[%s2] sm:$0x1]
    %v26 = vperm.slane %v24, 0
    %vm28 = vcmask 523264
    %v30 = vsel %vm28, %v15, 0
    %32 = vmatpush.msra.mxu0 0.0
    %33 = vmatpush.msra.mxu0 0.0
    %34 = vmatpush.msra.mxu0 0.0
    %35 = vmatpush.msra.mxu0 0.0
    %36 = vmatpush.msra.mxu0 0.0
    %37 = vmatpush.msra.mxu0 0.0
    %38 = vmatpush.msra.mxu0 0.0
    %39 = vmatpush.msra.mxu0 0.0
    %40 = vmatpush.msra.mxu0 %v23
    %41 = vmatpush.msra.mxu0 %v22
    %42 = vmatpush.msra.mxu0 %v21
    %43 = vmatpush.msra.mxu0 %v20
    %44 = vmatpush.msra.mxu0 %v19
    %45 = vmatpush.msra.mxu0 %v18
    %46 = vmatpush.msra.mxu0 %v17
    %47 = vmatpush.msra.mxu0 %v16
    %48 = vmatmul.f32.gmra.mxu0 %v30
    %v49 = vpop.f32.mrf.mxu0
    %v50 = vadd.f32 %v26, %v49
    %51 = vdwg.mxu0
    %vm52 = vcmask 58368
    %53 = vst.msk [vmem:[#allocation2] sm:$0x3] %vm52, %v50
    // Predicated region
    $region14: #{tpu_custom_call.1} parent=1 // pred_check
      _
    $region15: #{tpu_custom_call.1} parent=1 // pred_check_branch
      %55 = sbr.rel (0) target = $region17
    $region16: #{tpu_custom_call.1} parent=1 // pred_region
      %57 = vsyncadd [#allocation3], 0
      %s59 = sshll.u32 [#allocation2], 4
      %s60 = int_to_ptr.vmem [resolvable:$true] %s59
      %s61 = sshll.u32 %s3, 4
      %s62 = int_to_ptr.hbm [resolvable:$true] %s61
      %64 = dma.vmem_to_hbm [thread:$0]  %s60, 32, %s62, [#allocation3]
    $region17: #{tpu_custom_call.1} parent=1 // pred_fallthru
      _
    // Predicated region
    $region18: #{tpu_custom_call.1} parent=1 // pred_check
      _
    $region19: #{tpu_custom_call.1} parent=1 // pred_check_branch
      %66 = sbr.rel (0) target = $region21
    $region20: #{tpu_custom_call.1} parent=1 // pred_region
      %68 = dma.done [#allocation3], 32
    $region21: #{tpu_custom_call.1} parent=1 // pred_fallthru
      _
    %69 = vsyncpa [#allocation3], 1

</llo_original>
